<compile_context>
chip_gen: v5e
topology: v5e:2x2
jax: 0.10.0
libtpu: 0.0.40
codegen_flags: <defaults>
</compile_context>

<pallas_src>
import jax
import jax.numpy as jnp
import numpy as np
from jax import lax
from jax.experimental import pallas as pl
from jax.experimental.pallas import tpu as pltpu


def _actor_kernel(state_ref, goal_ref, w1s_ref, w1g_ref, b1_ref,
                  w2_ref, b2_ref, wh_ref, bh_ref, out_ref):
    f32 = jnp.float32
    bf16 = jnp.bfloat16

    # fc1 (state half): bf16 x bf16 MXU dot, f32 accumulate.  Only the small
    # (bm, state_dim) activation is converted; the bf16 weight feeds the MXU
    # directly at its native rate on v5e / v6e / v7x.
    h1 = jnp.dot(state_ref[...].astype(bf16), w1s_ref[...],
                 preferred_element_type=f32)

    # fc1 (goal half): K == goal_dim (3) -> three broadcasted VPU FMAs instead
    # of a second dependent MXU pass.  All f32 (w1g stored f32), VALU has slack.
    goal = goal_ref[...]
    w1g = w1g_ref[...]
    for k in range(goal.shape[1]):          # static, tiny loop (goal_dim == 3)
        h1 = h1 + goal[:, k:k + 1] * w1g[k:k + 1, :]

    h1 = jnp.maximum(h1 + b1_ref[...], 0.0)

    # fc2 + relu: cast the (bm,256) activation to bf16 (8x fewer elements than
    # the 256x256 weight would be), bf16 x bf16 MXU dot, f32 accumulate.
    h2 = jnp.dot(h1.astype(bf16), w2_ref[...], preferred_element_type=f32)
    h2 = jnp.maximum(h2 + b2_ref[...], 0.0)

    # Fused heads: one matmul producing [mean | log_std].
    head = jnp.dot(h2.astype(bf16), wh_ref[...],
                   preferred_element_type=f32) + bh_ref[...]

    # clamp + exp applied only to the log_std half via a column mask
    # (no lane slicing / concatenation inside vregs; the wasted exp on the
    # mean half rides the otherwise-idle EUP slot).
    a_dim = out_ref.shape[-1] // 2
    col = lax.broadcasted_iota(jnp.int32, head.shape, 1)
    std = jnp.exp(jnp.clip(head, -20.0, 2.0))
    out_ref[...] = jnp.where(col >= a_dim, std, head).astype(out_ref.dtype)


def _round_up(x, m):
    return ((x + m - 1) // m) * m


@jax.jit
def actor_forward(state, goal, params):
    """Pallas-backed equivalent of Actor.forward -> (mean, std)."""
    B, state_dim = state.shape
    goal_dim = goal.shape[1]
    hidden = params["w2"].shape[0]
    two_a = params["w_head"].shape[1]
    a_dim = two_a // 2

    # Batch tiling policy (see header).
    MAX_BM = 1024
    if B <= 256:
        bm = B
        n_blocks = 1
    else:
        n_blocks = max(2, pl.cdiv(B, MAX_BM))
        bm = _round_up(pl.cdiv(B, n_blocks), 8)
    b_pad = n_blocks * bm
    if b_pad != B:
        pad = b_pad - B
        state = jnp.pad(state, ((0, pad), (0, 0)))
        goal = jnp.pad(goal, ((0, pad), (0, 0)))
    grid = (n_blocks,)

    row = lambda i: (i, 0)   # batch-tiled operands
    rep = lambda i: (0, 0)   # weights / biases: constant block -> resident

    in_specs = [
        pl.BlockSpec((bm, state_dim), row),
        pl.BlockSpec((bm, goal_dim), row),
        pl.BlockSpec(params["w1s"].shape, rep),
        pl.BlockSpec(params["w1g"].shape, rep),
        pl.BlockSpec(params["b1"].shape, rep),
        pl.BlockSpec(params["w2"].shape, rep),
        pl.BlockSpec(params["b2"].shape, rep),
        pl.BlockSpec(params["w_head"].shape, rep),
        pl.BlockSpec(params["b_head"].shape, rep),
    ]
    out_spec = pl.BlockSpec((bm, two_a), row)

    flops = 2 * b_pad * (state_dim * hidden + goal_dim * hidden
                         + hidden * hidden + hidden * two_a)
    weight_bytes = sum(int(np.prod(params[k].shape)) * params[k].dtype.itemsize
                       for k in ("w1s", "w1g", "b1", "w2", "b2",
                                 "w_head", "b_head"))
    bytes_accessed = int((state.size + goal.size + b_pad * two_a) * 4
                         + weight_bytes)
    cost = pl.CostEstimate(flops=int(flops),
                           transcendentals=int(b_pad * two_a),
                           bytes_accessed=bytes_accessed)

    out = pl.pallas_call(
        _actor_kernel,
        out_shape=jax.ShapeDtypeStruct((b_pad, two_a), jnp.float32),
        grid=grid,
        in_specs=in_specs,
        out_specs=out_spec,
        compiler_params=pltpu.CompilerParams(dimension_semantics=("parallel",)),
        cost_estimate=cost,
    )(state, goal,
      params["w1s"], params["w1g"], params["b1"],
      params["w2"], params["b2"],
      params["w_head"], params["b_head"])

    out = out[:B]
    return out[:, :a_dim], out[:, a_dim:]


def init_actor_params(key, state_dim, goal_dim, action_dim, hidden=256,
                      weight_dtype=jnp.bfloat16):
    """PyTorch-style nn.Linear init, then packed for the fused kernel:
    fc1 weight split into (state, goal) halves; mean/log_std heads concatenated.
    Big weights stored transposed (in, out) in bf16 (halves weight DMA); the
    tiny goal half and all biases stay f32 (used on the VPU)."""
    in_dim = state_dim + goal_dim

    def linear(k, fan_in, fan_out):
        kw, kb = jax.random.split(k)
        bound = 1.0 / np.sqrt(fan_in)
        w = jax.random.uniform(kw, (fan_in, fan_out), jnp.float32, -bound, bound)
        b = jax.random.uniform(kb, (1, fan_out), jnp.float32, -bound, bound)
        return w, b

    k1, k2, k3, k4 = jax.random.split(key, 4)
    w1, b1 = linear(k1, in_dim, hidden)
    w2, b2 = linear(k2, hidden, hidden)
    w3, b3 = linear(k3, hidden, action_dim)   # fc3 -> mean
    w4, b4 = linear(k4, hidden, action_dim)   # log_std head

    wd = weight_dtype
    return dict(
        w1s=w1[:state_dim].astype(wd),        # fc1 split: no runtime concat
        w1g=w1[state_dim:],                   # f32: used as VPU FMAs (K=3)
        b1=b1,
        w2=w2.astype(wd), b2=b2,
        w_head=jnp.concatenate([w3, w4], axis=1).astype(wd),   # fused heads
        b_head=jnp.concatenate([b3, b4], axis=1),
    )


def actor_forward_ref(state, goal, params):
    """Pure-JAX reference mirroring the kernel math exactly
    (bf16 x bf16 dots with f32 accumulation, f32 FMAs for the goal half)."""
    f32, bf16 = jnp.float32, jnp.bfloat16
    h1 = jnp.dot(state.astype(bf16), params["w1s"], preferred_element_type=f32)
    for k in range(goal.shape[1]):
        h1 = h1 + goal[:, k:k + 1] * params["w1g"][k:k + 1, :]
    h1 = jax.nn.relu(h1 + params["b1"])
    h2 = jnp.dot(h1.astype(bf16), params["w2"], preferred_element_type=f32)
    h2 = jax.nn.relu(h2 + params["b2"])
    head = jnp.dot(h2.astype(bf16), params["w_head"],
                   preferred_element_type=f32) + params["b_head"]
    a = head.shape[1] // 2
    return head[:, :a], jnp.exp(jnp.clip(head[:, a:], -20.0, 2.0))


if __name__ == "__main__":
    # Shapes consistent with the module (state_dim = nq + nv, goal_dim = 3).
    state_dim, goal_dim, action_dim = 32, 3, 8

    key = jax.random.PRNGKey(0)
    kp, ks, kg, ks2, kg2, ks3, kg3 = jax.random.split(key, 7)
    params = init_actor_params(kp, state_dim, goal_dim, action_dim)

    # Tiny batch (single block, grid of 1).
    B = 2
    state = jax.random.normal(ks, (B, state_dim), jnp.float32)
    goal = jax.random.normal(kg, (B, goal_dim), jnp.float32)
    mean, std = jax.block_until_ready(actor_forward(state, goal, params))
    mean_r, std_r = actor_forward_ref(state, goal, params)
    np.testing.assert_allclose(np.asarray(mean), np.asarray(mean_r), rtol=2e-3, atol=2e-3)
    np.testing.assert_allclose(np.asarray(std), np.asarray(std_r), rtol=2e-3, atol=2e-3)

    # B = 256: still a single block (no per-step overhead on 1-TC chips).
    B2 = 256
    state2 = jax.random.normal(ks2, (B2, state_dim), jnp.float32)
    goal2 = jax.random.normal(kg2, (B2, goal_dim), jnp.float32)
    mean2, std2 = jax.block_until_ready(actor_forward(state2, goal2, params))
    mean2_r, std2_r = actor_forward_ref(state2, goal2, params)
    np.testing.assert_allclose(np.asarray(mean2), np.asarray(mean2_r), rtol=2e-3, atol=2e-3)
    np.testing.assert_allclose(np.asarray(std2), np.asarray(std2_r), rtol=2e-3, atol=2e-3)

    # B = 300 (not a multiple of 128): padded to 2 "parallel" blocks of 152 rows
    # so both v7x TensorCores get work; padded tail rows are trimmed.
    B3 = 300
    state3 = jax.random.normal(ks3, (B3, state_dim), jnp.float32)
    goal3 = jax.random.normal(kg3, (B3, goal_dim), jnp.float32)
    mean3, std3 = jax.block_until_ready(actor_forward(state3, goal3, params))
    mean3_r, std3_r = actor_forward_ref(state3, goal3, params)
    np.testing.assert_allclose(np.asarray(mean3), np.asarray(mean3_r), rtol=2e-3, atol=2e-3)
    np.testing.assert_allclose(np.asarray(std3), np.asarray(std3_r), rtol=2e-3, atol=2e-3)

    # TODO(synk): Actor.sample (rsample + tanh + log_prob) is stochastic policy
    # sampling and is intentionally left outside the kernel (forward() only).
    print("KERNEL_OK")
</pallas_src>

<mosaic_0001>
module attributes {stable_mosaic.version = 11 : i64} {
  func.func @_actor_kernel(%arg0: i32, %arg1: memref<2x32xf32, #tpu.memory_space<vmem>>, %arg2: memref<2x3xf32, #tpu.memory_space<vmem>>, %arg3: memref<32x256xbf16, #tpu.memory_space<vmem>>, %arg4: memref<3x256xf32, #tpu.memory_space<vmem>>, %arg5: memref<1x256xf32, #tpu.memory_space<vmem>>, %arg6: memref<256x256xbf16, #tpu.memory_space<vmem>>, %arg7: memref<1x256xf32, #tpu.memory_space<vmem>>, %arg8: memref<256x16xbf16, #tpu.memory_space<vmem>>, %arg9: memref<1x16xf32, #tpu.memory_space<vmem>>, %arg10: memref<2x16xf32, #tpu.memory_space<vmem>>) attributes {dimension_semantics = [#tpu.dimension_semantics<parallel>], iteration_bounds = array<i64: 1>, scalar_prefetch = 0 : i64, scratch_operands = 0 : i64, tpu.core_type = #tpu.core_type<tc>, window_params = [{transform_indices = @transform_0, window_bounds = array<i64: 2, 32>}, {transform_indices = @transform_1, window_bounds = array<i64: 2, 3>}, {pipeline_mode = #tpu.pipeline_mode<synchronous>, transform_indices = @transform_2, window_bounds = array<i64: 32, 256>}, {pipeline_mode = #tpu.pipeline_mode<synchronous>, transform_indices = @transform_3, window_bounds = array<i64: 3, 256>}, {pipeline_mode = #tpu.pipeline_mode<synchronous>, transform_indices = @transform_4, window_bounds = array<i64: 1, 256>}, {pipeline_mode = #tpu.pipeline_mode<synchronous>, transform_indices = @transform_5, window_bounds = array<i64: 256, 256>}, {pipeline_mode = #tpu.pipeline_mode<synchronous>, transform_indices = @transform_6, window_bounds = array<i64: 1, 256>}, {pipeline_mode = #tpu.pipeline_mode<synchronous>, transform_indices = @transform_7, window_bounds = array<i64: 256, 16>}, {pipeline_mode = #tpu.pipeline_mode<synchronous>, transform_indices = @transform_8, window_bounds = array<i64: 1, 16>}, {transform_indices = @transform_9, window_bounds = array<i64: 2, 16>}]} {
    %c0 = arith.constant 0 : index
    %c0_0 = arith.constant 0 : index
    %0 = vector.load %arg1[%c0, %c0_0] : memref<2x32xf32, #tpu.memory_space<vmem>>, vector<2x32xf32>
    %1 = arith.truncf %0 : vector<2x32xf32> to vector<2x32xbf16>
    %c0_1 = arith.constant 0 : index
    %c0_2 = arith.constant 0 : index
    %2 = vector.load %arg3[%c0_1, %c0_2] : memref<32x256xbf16, #tpu.memory_space<vmem>>, vector<32x256xbf16>
    %cst = arith.constant dense<0.000000e+00> : vector<2x256xf32>
    %3 = tpu.matmul %1, %2, %cst {dimension_numbers = #tpu.dot_dimension_numbers<[1], [0], [0], [1], [0, 0, 1, 1], [], []>} : vector<2x32xbf16>, vector<32x256xbf16>, vector<2x256xf32> -> vector<2x256xf32>
    %c0_3 = arith.constant 0 : index
    %c0_4 = arith.constant 0 : index
    %4 = vector.load %arg2[%c0_3, %c0_4] : memref<2x3xf32, #tpu.memory_space<vmem>>, vector<2x3xf32>
    %c0_5 = arith.constant 0 : index
    %c0_6 = arith.constant 0 : index
    %5 = vector.load %arg4[%c0_5, %c0_6] : memref<3x256xf32, #tpu.memory_space<vmem>>, vector<3x256xf32>
    %6 = vector.extract_strided_slice %4 {offsets = [0, 0], sizes = [2, 1], strides = [1, 1]} : vector<2x3xf32> to vector<2x1xf32>
    %7 = vector.extract_strided_slice %5 {offsets = [0, 0], sizes = [1, 256], strides = [1, 1]} : vector<3x256xf32> to vector<1x256xf32>
    %8 = vector.broadcast %6 : vector<2x1xf32> to vector<2x256xf32>
    %9 = vector.broadcast %7 : vector<1x256xf32> to vector<2x256xf32>
    %10 = arith.mulf %8, %9 : vector<2x256xf32>
    %11 = arith.addf %3, %10 : vector<2x256xf32>
    %12 = vector.extract_strided_slice %4 {offsets = [0, 1], sizes = [2, 1], strides = [1, 1]} : vector<2x3xf32> to vector<2x1xf32>
    %13 = vector.extract_strided_slice %5 {offsets = [1, 0], sizes = [1, 256], strides = [1, 1]} : vector<3x256xf32> to vector<1x256xf32>
    %14 = vector.broadcast %12 : vector<2x1xf32> to vector<2x256xf32>
    %15 = vector.broadcast %13 : vector<1x256xf32> to vector<2x256xf32>
    %16 = arith.mulf %14, %15 : vector<2x256xf32>
    %17 = arith.addf %11, %16 : vector<2x256xf32>
    %18 = vector.extract_strided_slice %4 {offsets = [0, 2], sizes = [2, 1], strides = [1, 1]} : vector<2x3xf32> to vector<2x1xf32>
    %19 = vector.extract_strided_slice %5 {offsets = [2, 0], sizes = [1, 256], strides = [1, 1]} : vector<3x256xf32> to vector<1x256xf32>
    %20 = vector.broadcast %18 : vector<2x1xf32> to vector<2x256xf32>
    %21 = vector.broadcast %19 : vector<1x256xf32> to vector<2x256xf32>
    %22 = arith.mulf %20, %21 : vector<2x256xf32>
    %23 = arith.addf %17, %22 : vector<2x256xf32>
    %c0_7 = arith.constant 0 : index
    %c0_8 = arith.constant 0 : index
    %24 = vector.load %arg5[%c0_7, %c0_8] : memref<1x256xf32, #tpu.memory_space<vmem>>, vector<1x256xf32>
    %25 = vector.broadcast %24 : vector<1x256xf32> to vector<2x256xf32>
    %26 = arith.addf %23, %25 : vector<2x256xf32>
    %cst_9 = arith.constant 0.000000e+00 : f32
    %27 = vector.broadcast %cst_9 : f32 to vector<2x256xf32>
    %28 = arith.maximumf %26, %27 : vector<2x256xf32>
    %29 = arith.truncf %28 : vector<2x256xf32> to vector<2x256xbf16>
    %c0_10 = arith.constant 0 : index
    %c0_11 = arith.constant 0 : index
    %30 = vector.load %arg6[%c0_10, %c0_11] : memref<256x256xbf16, #tpu.memory_space<vmem>>, vector<256x256xbf16>
    %cst_12 = arith.constant dense<0.000000e+00> : vector<2x256xf32>
    %31 = tpu.matmul %29, %30, %cst_12 {dimension_numbers = #tpu.dot_dimension_numbers<[1], [0], [0], [1], [0, 0, 1, 1], [], []>} : vector<2x256xbf16>, vector<256x256xbf16>, vector<2x256xf32> -> vector<2x256xf32>
    %c0_13 = arith.constant 0 : index
    %c0_14 = arith.constant 0 : index
    %32 = vector.load %arg7[%c0_13, %c0_14] : memref<1x256xf32, #tpu.memory_space<vmem>>, vector<1x256xf32>
    %33 = vector.broadcast %32 : vector<1x256xf32> to vector<2x256xf32>
    %34 = arith.addf %31, %33 : vector<2x256xf32>
    %cst_15 = arith.constant 0.000000e+00 : f32
    %35 = vector.broadcast %cst_15 : f32 to vector<2x256xf32>
    %36 = arith.maximumf %34, %35 : vector<2x256xf32>
    %37 = arith.truncf %36 : vector<2x256xf32> to vector<2x256xbf16>
    %c0_16 = arith.constant 0 : index
    %c0_17 = arith.constant 0 : index
    %38 = vector.load %arg8[%c0_16, %c0_17] : memref<256x16xbf16, #tpu.memory_space<vmem>>, vector<256x16xbf16>
    %cst_18 = arith.constant dense<0.000000e+00> : vector<2x16xf32>
    %39 = tpu.matmul %37, %38, %cst_18 {dimension_numbers = #tpu.dot_dimension_numbers<[1], [0], [0], [1], [0, 0, 1, 1], [], []>} : vector<2x256xbf16>, vector<256x16xbf16>, vector<2x16xf32> -> vector<2x16xf32>
    %c0_19 = arith.constant 0 : index
    %c0_20 = arith.constant 0 : index
    %40 = vector.load %arg9[%c0_19, %c0_20] : memref<1x16xf32, #tpu.memory_space<vmem>>, vector<1x16xf32>
    %41 = vector.broadcast %40 : vector<1x16xf32> to vector<2x16xf32>
    %42 = arith.addf %39, %41 : vector<2x16xf32>
    %43 = tpu.iota {dimensions = array<i32: 1>} : vector<2x16xi32>
    %cst_21 = arith.constant -2.000000e+01 : f32
    %cst_22 = arith.constant 2.000000e+00 : f32
    %44 = vector.broadcast %cst_21 : f32 to vector<2x16xf32>
    %45 = arith.maximumf %44, %42 : vector<2x16xf32>
    %46 = vector.broadcast %cst_22 : f32 to vector<2x16xf32>
    %47 = arith.minimumf %46, %45 : vector<2x16xf32>
    %48 = math.exp %47 : vector<2x16xf32>
    %c8_i32 = arith.constant 8 : i32
    %49 = vector.broadcast %c8_i32 : i32 to vector<2x16xi32>
    %50 = arith.cmpi sge, %43, %49 : vector<2x16xi32>
    %51 = arith.select %50, %48, %42 : vector<2x16xi1>, vector<2x16xf32>
    %c0_23 = arith.constant 0 : index
    %c0_24 = arith.constant 0 : index
    %52 = vector.load %arg10[%c0_23, %c0_24] : memref<2x16xf32, #tpu.memory_space<vmem>>, vector<2x16xf32>
    tpu.vector_store %arg10[%c0_23, %c0_24], %51 {strides = array<i32>} : memref<2x16xf32, #tpu.memory_space<vmem>>, vector<2x16xf32>,
    return
  }
  func.func @transform_0(%arg0: i32) -> (i32, i32) {
    %c0_i32 = arith.constant 0 : i32
    %c0_i32_0 = arith.constant 0 : i32
    return %arg0, %c0_i32 : i32, i32
  }
  func.func @transform_1(%arg0: i32) -> (i32, i32) {
    %c0_i32 = arith.constant 0 : i32
    %c0_i32_0 = arith.constant 0 : i32
    return %arg0, %c0_i32 : i32, i32
  }
  func.func @transform_2(%arg0: i32) -> (i32, i32) {
    %c0_i32 = arith.constant 0 : i32
    %c0_i32_0 = arith.constant 0 : i32
    %c0_i32_1 = arith.constant 0 : i32
    return %c0_i32, %c0_i32_0 : i32, i32
  }
  func.func @transform_3(%arg0: i32) -> (i32, i32) {
    %c0_i32 = arith.constant 0 : i32
    %c0_i32_0 = arith.constant 0 : i32
    %c0_i32_1 = arith.constant 0 : i32
    return %c0_i32, %c0_i32_0 : i32, i32
  }
  func.func @transform_4(%arg0: i32) -> (i32, i32) {
    %c0_i32 = arith.constant 0 : i32
    %c0_i32_0 = arith.constant 0 : i32
    %c0_i32_1 = arith.constant 0 : i32
    return %c0_i32, %c0_i32_0 : i32, i32
  }
  func.func @transform_5(%arg0: i32) -> (i32, i32) {
    %c0_i32 = arith.constant 0 : i32
    %c0_i32_0 = arith.constant 0 : i32
    %c0_i32_1 = arith.constant 0 : i32
    return %c0_i32, %c0_i32_0 : i32, i32
  }
  func.func @transform_6(%arg0: i32) -> (i32, i32) {
    %c0_i32 = arith.constant 0 : i32
    %c0_i32_0 = arith.constant 0 : i32
    %c0_i32_1 = arith.constant 0 : i32
    return %c0_i32, %c0_i32_0 : i32, i32
  }
  func.func @transform_7(%arg0: i32) -> (i32, i32) {
    %c0_i32 = arith.constant 0 : i32
    %c0_i32_0 = arith.constant 0 : i32
    %c0_i32_1 = arith.constant 0 : i32
    return %c0_i32, %c0_i32_0 : i32, i32
  }
  func.func @transform_8(%arg0: i32) -> (i32, i32) {
    %c0_i32 = arith.constant 0 : i32
    %c0_i32_0 = arith.constant 0 : i32
    %c0_i32_1 = arith.constant 0 : i32
    return %c0_i32, %c0_i32_0 : i32, i32
  }
  func.func @transform_9(%arg0: i32) -> (i32, i32) {
    %c0_i32 = arith.constant 0 : i32
    %c0_i32_0 = arith.constant 0 : i32
    return %arg0, %c0_i32 : i32, i32
  }
}

</mosaic_0001>

<llo_original>
// kernel: actor_forward.1
$region0: #{actor_forward.1}
  #allocation0 [shape = 'u32[]', space=smem, size = 0x4, offset = 0x4, fixed_abs, tag = 'smem constant byte address 0x4 - core index']
  #allocation1 [shape = 'u32[72,128]{1,0:T(1,128)}', space=vmem, size = 0x9000, scoped, tag = 'internal scratch']
  %s0 = inlined_call_operand.vmem [shape: f32[2,32], index: 0, kind: input, shape index: {}]
  %s1 = inlined_call_operand.vmem [shape: f32[2,3], index: 1, kind: input, shape index: {}]
  %s2 = inlined_call_operand.vmem [shape: bf16[32,256], index: 2, kind: input, shape index: {}]
  %s3 = inlined_call_operand.vmem [shape: f32[3,256], index: 3, kind: input, shape index: {}]
  %s4 = inlined_call_operand.vmem [shape: f32[1,256], index: 4, kind: input, shape index: {}]
  %s5 = inlined_call_operand.hbm [shape: bf16[256,256], index: 5, kind: input, shape index: {}]
  %s6 = inlined_call_operand.vmem [shape: f32[1,256], index: 6, kind: input, shape index: {}]
  %s7 = inlined_call_operand.vmem [shape: bf16[256,16], index: 7, kind: input, shape index: {}]
  %s8 = inlined_call_operand.vmem [shape: f32[1,16], index: 8, kind: input, shape index: {}]
  %s9 = inlined_call_operand.vmem [shape: f32[2,16], index: 9, kind: output, shape index: {}]
  %s10 = sld [smem:[#allocation0]]
  $region50: #{actor_forward.1} parent=0
    _
  %s12 = ssub.s32 1, %s10
  %s13 = scalar_select 0, %s12, %s10
  $region1: #{actor_forward.1} parent=0
    #allocation2 [shape = 'u8[131072]{0}', space=vmem, size = 0x20000, scoped, tag = 'input window, operand 5, single buffered']
    #allocation3 [shape = 's32[1]{0}', space=sflag, size = 0x4, scoped, tag = 'scoped memory for actor_forward.1']
    %14 = vsyncpa [#allocation3], 0
    // Predicated region
    $region2: #{actor_forward.1} parent=1 // pred_check
      _
    $region3: #{actor_forward.1} parent=1 // pred_check_branch
      %16 = sbr.rel (0) target = $region5
    $region4: #{actor_forward.1} parent=1 // pred_region
      _
    $region5: #{actor_forward.1} parent=1 // pred_fallthru
      _
    // Predicated region
    $region6: #{actor_forward.1} parent=1 // pred_check
      _
    $region7: #{actor_forward.1} parent=1 // pred_check_branch
      %18 = sbr.rel (0) target = $region9
    $region8: #{actor_forward.1} parent=1 // pred_region
      _
    $region9: #{actor_forward.1} parent=1 // pred_fallthru
      _
    // Predicated region
    $region10: #{actor_forward.1} parent=1 // pred_check
      _
    $region11: #{actor_forward.1} parent=1 // pred_check_branch
      %20 = sbr.rel (0) target = $region13
    $region12: #{actor_forward.1} parent=1 // pred_region
      _
    $region13: #{actor_forward.1} parent=1 // pred_fallthru
      _
    // Predicated region
    $region14: #{actor_forward.1} parent=1 // pred_check
      _
    $region15: #{actor_forward.1} parent=1 // pred_check_branch
      %22 = sbr.rel (0) target = $region17
    $region16: #{actor_forward.1} parent=1 // pred_region
      _
    $region17: #{actor_forward.1} parent=1 // pred_fallthru
      _
    // Predicated region
    $region18: #{actor_forward.1} parent=1 // pred_check
      _
    $region19: #{actor_forward.1} parent=1 // pred_check_branch
      %24 = sbr.rel (0) target = $region21
    $region20: #{actor_forward.1} parent=1 // pred_region
      _
    $region21: #{actor_forward.1} parent=1 // pred_fallthru
      _
    // Predicated region
    $region22: #{actor_forward.1} parent=1 // pred_check
      _
    $region23: #{actor_forward.1} parent=1 // pred_check_branch
      %26 = sbr.rel (0) target = $region25
    $region24: #{actor_forward.1} parent=1 // pred_region
      %28 = vsyncadd [#allocation3], 0
      %s29 = sshll.u32 %s5, 4
      %s30 = int_to_ptr.hbm [resolvable:$true] %s29
      %s31 = sshll.u32 [#allocation2], 4
      %s32 = int_to_ptr.vmem [resolvable:$true] %s31
      %37 = dma.hbm_to_vmem [thread:$0]  %s30, 4096, %s32, [#allocation3], 128, 128, 8
    $region25: #{actor_forward.1} parent=1 // pred_fallthru
      _
    // Predicated region
    $region26: #{actor_forward.1} parent=1 // pred_check
      _
    $region27: #{actor_forward.1} parent=1 // pred_check_branch
      %39 = sbr.rel (0) target = $region29
    $region28: #{actor_forward.1} parent=1 // pred_region
      _
    $region29: #{actor_forward.1} parent=1 // pred_fallthru
      _
    // Predicated region
    $region30: #{actor_forward.1} parent=1 // pred_check
      _
    $region31: #{actor_forward.1} parent=1 // pred_check_branch
      %41 = sbr.rel (0) target = $region33
    $region32: #{actor_forward.1} parent=1 // pred_region
      _
    $region33: #{actor_forward.1} parent=1 // pred_fallthru
      _
    // Predicated region
    $region34: #{actor_forward.1} parent=1 // pred_check
      _
    $region35: #{actor_forward.1} parent=1 // pred_check_branch
      %43 = sbr.rel (0) target = $region37
    $region36: #{actor_forward.1} parent=1 // pred_region
      _
    $region37: #{actor_forward.1} parent=1 // pred_fallthru
      _
    // Predicated region
    $region38: #{actor_forward.1} parent=1 // pred_check
      _
    $region39: #{actor_forward.1} parent=1 // pred_check_branch
      %45 = sbr.rel (0) target = $region41
    $region40: #{actor_forward.1} parent=1 // pred_region
      %47 = dma.done [#allocation3], 4096
    $region41: #{actor_forward.1} parent=1 // pred_fallthru
      _
    %v49 = vld [vmem:[%s0] sm:$0x3]
    %v50 = vpack.c.bf16 %v49, %v49
    %v51 = vld [vmem:[%s2] sm:$0xff]
    %v52 = vld [vmem:[%s2 + $0x8] sm:$0xff]
    %v53 = vld [vmem:[%s2 + $0x10] sm:$0xff]
    %v54 = vld [vmem:[%s2 + $0x18] sm:$0xff]
    %v55 = vld [vmem:[%s1] sm:$0x3]
    %v56 = vld [vmem:[%s3] sm:$0x77]
    %58 = vset.pattern.permute.xlu0 0
    %59 = vperm.xlu0 %58, %v55
    %v60 = vpop.permute.xlu0 %59
    %v63 = vperm.slane %v56, 0
    %v64 = vperm.slane %v56, 4
    %v67 = vperm.slane %v63, 0
    %v68 = vperm.slane %v64, 0
    %v69 = vmul.f32 %v60, %v67
    %v70 = vmul.f32 %v60, %v68
    %v75 = vunpack.c.l.b16 %v51
    %v76 = vunpack.c.h.b16 %v51
    %v77 = vunpack.c.l.b16 %v52
    %v78 = vunpack.c.h.b16 %v52
    %v79 = vunpack.c.l.b16 %v53
    %v80 = vunpack.c.h.b16 %v53
    %v81 = vunpack.c.l.b16 %v54
    %v82 = vunpack.c.h.b16 %v54
    %v83 = vpack.c.b16 %v77, %v75
    %v84 = vpack.c.b16 %v78, %v76
    %v85 = vpack.c.b16 %v81, %v79
    %v86 = vpack.c.b16 %v82, %v80
    %vm91 = vcmask 261120
    %v93 = vsel %vm91, %v50, 0
    %95 = vmatpush.bf16.msra.mxu0 0
    %96 = vmatpush.bf16.msra.mxu0 0
    %97 = vmatpush.bf16.msra.mxu0 0
    %98 = vmatpush.bf16.msra.mxu0 0
    %99 = vmatpush.bf16.msra.mxu0 0
    %100 = vmatpush.bf16.msra.mxu0 0
    %101 = vmatpush.bf16.msra.mxu0 %v85
    %102 = vmatpush.bf16.msra.mxu0 %v83
    %103 = vmatmul.bf16.gmra.mxu0 %v93
    %v104 = vpop.f32.mrf.mxu0
    %v105 = vadd.f32 %v69, %v104
    %v106 = vpop.f32.mrf.mxu0
    %107 = vdwg.mxu0
    %108 = vmatpush.bf16.msra.mxu0 0
    %109 = vmatpush.bf16.msra.mxu0 0
    %110 = vmatpush.bf16.msra.mxu0 0
    %111 = vmatpush.bf16.msra.mxu0 0
    %112 = vmatpush.bf16.msra.mxu0 0
    %113 = vmatpush.bf16.msra.mxu0 0
    %114 = vmatpush.bf16.msra.mxu0 %v86
    %115 = vmatpush.bf16.msra.mxu0 %v84
    %116 = vmatmul.bf16.gmra.mxu0 %v93
    %v117 = vpop.f32.mrf.mxu0
    %v118 = vadd.f32 %v70, %v117
    %v119 = vpop.f32.mrf.mxu0
    %120 = vdwg.mxu0
    %121 = vset.pattern.permute.xlu0 1
    %122 = vperm.xlu0 %121, %v55
    %v123 = vpop.permute.xlu0 %122
    %v125 = vperm.slane %v56, 1
    %v126 = vperm.slane %v56, 5
    %v129 = vperm.slane %v125, 1
    %v130 = vperm.slane %v126, 1
    %v131 = vmul.f32 %v123, %v129
    %v132 = vmul.f32 %v123, %v130
    %v133 = vadd.f32 %v105, %v131
    %v134 = vadd.f32 %v118, %v132
    %135 = vset.pattern.permute.xlu0 2
    %136 = vperm.xlu0 %135, %v55
    %v137 = vpop.permute.xlu0 %136
    %v139 = vperm.slane %v56, 2
    %v140 = vperm.slane %v56, 6
    %v143 = vperm.slane %v139, 2
    %v144 = vperm.slane %v140, 2
    %v145 = vmul.f32 %v137, %v143
    %v146 = vmul.f32 %v137, %v144
    %v147 = vadd.f32 %v133, %v145
    %v148 = vadd.f32 %v134, %v146
    %v149 = vld [vmem:[%s4] sm:$0x3]
    %v151 = vperm.slane %v149, 0
    %v152 = vperm.slane %v149, 1
    %v155 = vadd.f32 %v147, %v151
    %v156 = vadd.f32 %v148, %v152
    %v157 = vmax.f32 %v155, 0.0
    %v158 = vmax.f32 %v156, 0.0
    %v159 = vpack.c.bf16 %v157, %v157
    %v160 = vpack.c.bf16 %v158, %v158
    %v161 = vld [vmem:[#allocation2] sm:$0xff]
    %v162 = vld [vmem:[#allocation2 + $0x8] sm:$0xff]
    %v163 = vld [vmem:[#allocation2 + $0x10] sm:$0xff]
    %v164 = vld [vmem:[#allocation2 + $0x18] sm:$0xff]
    %v165 = vld [vmem:[#allocation2 + $0x20] sm:$0xff]
    %v166 = vld [vmem:[#allocation2 + $0x28] sm:$0xff]
    %v167 = vld [vmem:[#allocation2 + $0x30] sm:$0xff]
    %v168 = vld [vmem:[#allocation2 + $0x38] sm:$0xff]
    %v169 = vld [vmem:[#allocation2 + $0x40] sm:$0xff]
    %v170 = vld [vmem:[#allocation2 + $0x48] sm:$0xff]
    %v171 = vld [vmem:[#allocation2 + $0x50] sm:$0xff]
    %v172 = vld [vmem:[#allocation2 + $0x58] sm:$0xff]
    %v173 = vld [vmem:[#allocation2 + $0x60] sm:$0xff]
    %v174 = vld [vmem:[#allocation2 + $0x68] sm:$0xff]
    %v175 = vld [vmem:[#allocation2 + $0x70] sm:$0xff]
    %v176 = vld [vmem:[#allocation2 + $0x78] sm:$0xff]
    %v177 = vld [vmem:[#allocation2 + $0x80] sm:$0xff]
    %v178 = vld [vmem:[#allocation2 + $0x88] sm:$0xff]
    %v179 = vld [vmem:[#allocation2 + $0x90] sm:$0xff]
    %v180 = vld [vmem:[#allocation2 + $0x98] sm:$0xff]
    %v181 = vld [vmem:[#allocation2 + $0xa0] sm:$0xff]
    %v182 = vld [vmem:[#allocation2 + $0xa8] sm:$0xff]
    %v183 = vld [vmem:[#allocation2 + $0xb0] sm:$0xff]
    %v184 = vld [vmem:[#allocation2 + $0xb8] sm:$0xff]
    %v185 = vld [vmem:[#allocation2 + $0xc0] sm:$0xff]
    %v186 = vld [vmem:[#allocation2 + $0xc8] sm:$0xff]
    %v187 = vld [vmem:[#allocation2 + $0xd0] sm:$0xff]
    %v188 = vld [vmem:[#allocation2 + $0xd8] sm:$0xff]
    %v189 = vld [vmem:[#allocation2 + $0xe0] sm:$0xff]
    %v190 = vld [vmem:[#allocation2 + $0xe8] sm:$0xff]
    %v191 = vld [vmem:[#allocation2 + $0xf0] sm:$0xff]
    %v192 = vld [vmem:[#allocation2 + $0xf8] sm:$0xff]
    %v193 = vld [vmem:[%s6] sm:$0x3]
    %v195 = vperm.slane %v193, 0
    %v196 = vperm.slane %v193, 1
    %v231 = vunpack.c.l.b16 %v161
    %v232 = vunpack.c.h.b16 %v161
    %v233 = vunpack.c.l.b16 %v162
    %v234 = vunpack.c.h.b16 %v162
    %v235 = vunpack.c.l.b16 %v163
    %v236 = vunpack.c.h.b16 %v163
    %v237 = vunpack.c.l.b16 %v164
    %v238 = vunpack.c.h.b16 %v164
    %v239 = vunpack.c.l.b16 %v165
    %v240 = vunpack.c.h.b16 %v165
    %v241 = vunpack.c.l.b16 %v166
    %v242 = vunpack.c.h.b16 %v166
    %v243 = vunpack.c.l.b16 %v167
    %v244 = vunpack.c.h.b16 %v167
    %v245 = vunpack.c.l.b16 %v168
    %v246 = vunpack.c.h.b16 %v168
    %v247 = vunpack.c.l.b16 %v169
    %v248 = vunpack.c.h.b16 %v169
    %v249 = vunpack.c.l.b16 %v170
    %v250 = vunpack.c.h.b16 %v170
    %v251 = vunpack.c.l.b16 %v171
    %v252 = vunpack.c.h.b16 %v171
    %v253 = vunpack.c.l.b16 %v172
    %v254 = vunpack.c.h.b16 %v172
    %v255 = vunpack.c.l.b16 %v173
    %v256 = vunpack.c.h.b16 %v173
    %v257 = vunpack.c.l.b16 %v174
    %v258 = vunpack.c.h.b16 %v174
    %v259 = vunpack.c.l.b16 %v175
    %v260 = vunpack.c.h.b16 %v175
    %v261 = vunpack.c.l.b16 %v176
    %v262 = vunpack.c.h.b16 %v176
    %v263 = vunpack.c.l.b16 %v177
    %v264 = vunpack.c.h.b16 %v177
    %v265 = vunpack.c.l.b16 %v178
    %v266 = vunpack.c.h.b16 %v178
    %v267 = vunpack.c.l.b16 %v179
    %v268 = vunpack.c.h.b16 %v179
    %v269 = vunpack.c.l.b16 %v180
    %v270 = vunpack.c.h.b16 %v180
    %v271 = vunpack.c.l.b16 %v181
    %v272 = vunpack.c.h.b16 %v181
    %v273 = vunpack.c.l.b16 %v182
    %v274 = vunpack.c.h.b16 %v182
    %v275 = vunpack.c.l.b16 %v183
    %v276 = vunpack.c.h.b16 %v183
    %v277 = vunpack.c.l.b16 %v184
    %v278 = vunpack.c.h.b16 %v184
    %v279 = vunpack.c.l.b16 %v185
    %v280 = vunpack.c.h.b16 %v185
    %v281 = vunpack.c.l.b16 %v186
    %v282 = vunpack.c.h.b16 %v186
    %v283 = vunpack.c.l.b16 %v187
    %v284 = vunpack.c.h.b16 %v187
    %v285 = vunpack.c.l.b16 %v188
    %v286 = vunpack.c.h.b16 %v188
    %v287 = vunpack.c.l.b16 %v189
    %v288 = vunpack.c.h.b16 %v189
    %v289 = vunpack.c.l.b16 %v190
    %v290 = vunpack.c.h.b16 %v190
    %v291 = vunpack.c.l.b16 %v191
    %v292 = vunpack.c.h.b16 %v191
    %v293 = vunpack.c.l.b16 %v192
    %v294 = vunpack.c.h.b16 %v192
    %v295 = vpack.c.b16 %v233, %v231
    %v296 = vpack.c.b16 %v234, %v232
    %v297 = vpack.c.b16 %v237, %v235
    %v298 = vpack.c.b16 %v238, %v236
    %v299 = vpack.c.b16 %v241, %v239
    %v300 = vpack.c.b16 %v242, %v240
    %v301 = vpack.c.b16 %v245, %v243
    %v302 = vpack.c.b16 %v246, %v244
    %v303 = vpack.c.b16 %v249, %v247
    %v304 = vpack.c.b16 %v250, %v248
    %v305 = vpack.c.b16 %v253, %v251
    %v306 = vpack.c.b16 %v254, %v252
    %v307 = vpack.c.b16 %v257, %v255
    %v308 = vpack.c.b16 %v258, %v256
    %v309 = vpack.c.b16 %v261, %v259
    %v310 = vpack.c.b16 %v262, %v260
    %v311 = vpack.c.b16 %v265, %v263
    %v312 = vpack.c.b16 %v266, %v264
    %v313 = vpack.c.b16 %v269, %v267
    %v314 = vpack.c.b16 %v270, %v268
    %v315 = vpack.c.b16 %v273, %v271
    %v316 = vpack.c.b16 %v274, %v272
    %v317 = vpack.c.b16 %v277, %v275
    %v318 = vpack.c.b16 %v278, %v276
    %v319 = vpack.c.b16 %v281, %v279
    %v320 = vpack.c.b16 %v282, %v280
    %v321 = vpack.c.b16 %v285, %v283
    %v322 = vpack.c.b16 %v286, %v284
    %v323 = vpack.c.b16 %v289, %v287
    %v324 = vpack.c.b16 %v290, %v288
    %v325 = vpack.c.b16 %v293, %v291
    %v326 = vpack.c.b16 %v294, %v292
    %359 = vmatpush.bf16.msra.mxu0 %v309
    %360 = vmatpush.bf16.msra.mxu0 %v307
    %361 = vmatpush.bf16.msra.mxu0 %v305
    %362 = vmatpush.bf16.msra.mxu0 %v303
    %363 = vmatpush.bf16.msra.mxu0 %v301
    %364 = vmatpush.bf16.msra.mxu0 %v299
    %365 = vmatpush.bf16.msra.mxu0 %v297
    %366 = vmatpush.bf16.msra.mxu0 %v295
    %367 = vmatmul.bf16.gmra.mxu0 %v159
    %v368 = vpop.f32.mrf.mxu0
    %v369 = vadd.f32 %v195, %v368
    %v370 = vpop.f32.mrf.mxu0
    %371 = vdwg.mxu0
    %372 = vmatpush.bf16.msra.mxu0 %v325
    %373 = vmatpush.bf16.msra.mxu0 %v323
    %374 = vmatpush.bf16.msra.mxu0 %v321
    %375 = vmatpush.bf16.msra.mxu0 %v319
    %376 = vmatpush.bf16.msra.mxu0 %v317
    %377 = vmatpush.bf16.msra.mxu0 %v315
    %378 = vmatpush.bf16.msra.mxu0 %v313
    %379 = vmatpush.bf16.msra.mxu0 %v311
    %380 = vmatmul.bf16.gmra.mxu0 %v160
    %v381 = vpop.f32.mrf.mxu0
    %v382 = vadd.f32 %v369, %v381
    %v383 = vpop.f32.mrf.mxu0
    %384 = vdwg.mxu0
    %385 = vmatpush.bf16.msra.mxu0 %v310
    %386 = vmatpush.bf16.msra.mxu0 %v308
    %387 = vmatpush.bf16.msra.mxu0 %v306
    %388 = vmatpush.bf16.msra.mxu0 %v304
    %389 = vmatpush.bf16.msra.mxu0 %v302
    %390 = vmatpush.bf16.msra.mxu0 %v300
    %391 = vmatpush.bf16.msra.mxu0 %v298
    %392 = vmatpush.bf16.msra.mxu0 %v296
    %393 = vmatmul.bf16.gmra.mxu0 %v159
    %v394 = vpop.f32.mrf.mxu0
    %v395 = vadd.f32 %v196, %v394
    %v396 = vpop.f32.mrf.mxu0
    %397 = vdwg.mxu0
    %398 = vmatpush.bf16.msra.mxu0 %v326
    %399 = vmatpush.bf16.msra.mxu0 %v324
    %400 = vmatpush.bf16.msra.mxu0 %v322
    %401 = vmatpush.bf16.msra.mxu0 %v320
    %402 = vmatpush.bf16.msra.mxu0 %v318
    %403 = vmatpush.bf16.msra.mxu0 %v316
    %404 = vmatpush.bf16.msra.mxu0 %v314
    %405 = vmatpush.bf16.msra.mxu0 %v312
    %406 = vmatmul.bf16.gmra.mxu0 %v160
    %v407 = vpop.f32.mrf.mxu0
    %v408 = vadd.f32 %v395, %v407
    %v409 = vpop.f32.mrf.mxu0
    %410 = vdwg.mxu0
    %v411 = vmax.f32 %v382, 0.0
    %v412 = vmax.f32 %v408, 0.0
    %v413 = vpack.c.bf16 %v411, %v411
    %v414 = vpack.c.bf16 %v412, %v412
    %v415 = vld [vmem:[%s7] sm:$0xf]
    %v416 = vld [vmem:[%s7 + $0x4] sm:$0xf]
    %v417 = vld [vmem:[%s7 + $0x8] sm:$0xf]
    %v418 = vld [vmem:[%s7 + $0xc] sm:$0xf]
    %v419 = vld [vmem:[%s7 + $0x10] sm:$0xf]
    %v420 = vld [vmem:[%s7 + $0x14] sm:$0xf]
    %v421 = vld [vmem:[%s7 + $0x18] sm:$0xf]
    %v422 = vld [vmem:[%s7 + $0x1c] sm:$0xf]
    %v423 = vld [vmem:[%s7 + $0x20] sm:$0xf]
    %v424 = vld [vmem:[%s7 + $0x24] sm:$0xf]
    %v425 = vld [vmem:[%s7 + $0x28] sm:$0xf]
    %v426 = vld [vmem:[%s7 + $0x2c] sm:$0xf]
    %v427 = vld [vmem:[%s7 + $0x30] sm:$0xf]
    %v428 = vld [vmem:[%s7 + $0x34] sm:$0xf]
    %v429 = vld [vmem:[%s7 + $0x38] sm:$0xf]
    %v430 = vld [vmem:[%s7 + $0x3c] sm:$0xf]
    %v431 = vld [vmem:[%s7 + $0x40] sm:$0xf]
    %v432 = vld [vmem:[%s7 + $0x44] sm:$0xf]
    %v433 = vld [vmem:[%s7 + $0x48] sm:$0xf]
    %v434 = vld [vmem:[%s7 + $0x4c] sm:$0xf]
    %v435 = vld [vmem:[%s7 + $0x50] sm:$0xf]
    %v436 = vld [vmem:[%s7 + $0x54] sm:$0xf]
    %v437 = vld [vmem:[%s7 + $0x58] sm:$0xf]
    %v438 = vld [vmem:[%s7 + $0x5c] sm:$0xf]
    %v439 = vld [vmem:[%s7 + $0x60] sm:$0xf]
    %v440 = vld [vmem:[%s7 + $0x64] sm:$0xf]
    %v441 = vld [vmem:[%s7 + $0x68] sm:$0xf]
    %v442 = vld [vmem:[%s7 + $0x6c] sm:$0xf]
    %v443 = vld [vmem:[%s7 + $0x70] sm:$0xf]
    %v444 = vld [vmem:[%s7 + $0x74] sm:$0xf]
    %v445 = vld [vmem:[%s7 + $0x78] sm:$0xf]
    %v446 = vld [vmem:[%s7 + $0x7c] sm:$0xf]
    %v447 = vld [vmem:[%s8] sm:$0x1]
    %v449 = vperm.slane %v447, 0
    %v483 = vunpack.c.l.b16 %v415
    %v484 = vunpack.c.l.b16 %v416
    %v485 = vunpack.c.l.b16 %v417
    %v486 = vunpack.c.l.b16 %v418
    %v487 = vunpack.c.l.b16 %v419
    %v488 = vunpack.c.l.b16 %v420
    %v489 = vunpack.c.l.b16 %v421
    %v490 = vunpack.c.l.b16 %v422
    %v491 = vunpack.c.l.b16 %v423
    %v492 = vunpack.c.l.b16 %v424
    %v493 = vunpack.c.l.b16 %v425
    %v494 = vunpack.c.l.b16 %v426
    %v495 = vunpack.c.l.b16 %v427
    %v496 = vunpack.c.l.b16 %v428
    %v497 = vunpack.c.l.b16 %v429
    %v498 = vunpack.c.l.b16 %v430
    %v499 = vunpack.c.l.b16 %v431
    %v500 = vunpack.c.l.b16 %v432
    %v501 = vunpack.c.l.b16 %v433
    %v502 = vunpack.c.l.b16 %v434
    %v503 = vunpack.c.l.b16 %v435
    %v504 = vunpack.c.l.b16 %v436
    %v505 = vunpack.c.l.b16 %v437
    %v506 = vunpack.c.l.b16 %v438
    %v507 = vunpack.c.l.b16 %v439
    %v508 = vunpack.c.l.b16 %v440
    %v509 = vunpack.c.l.b16 %v441
    %v510 = vunpack.c.l.b16 %v442
    %v511 = vunpack.c.l.b16 %v443
    %v512 = vunpack.c.l.b16 %v444
    %v513 = vunpack.c.l.b16 %v445
    %v514 = vunpack.c.l.b16 %v446
    %v515 = vpack.c.b16 %v484, %v483
    %v516 = vpack.c.b16 %v486, %v485
    %v517 = vpack.c.b16 %v488, %v487
    %v518 = vpack.c.b16 %v490, %v489
    %v519 = vpack.c.b16 %v492, %v491
    %v520 = vpack.c.b16 %v494, %v493
    %v521 = vpack.c.b16 %v496, %v495
    %v522 = vpack.c.b16 %v498, %v497
    %v523 = vpack.c.b16 %v500, %v499
    %v524 = vpack.c.b16 %v502, %v501
    %v525 = vpack.c.b16 %v504, %v503
    %v526 = vpack.c.b16 %v506, %v505
    %v527 = vpack.c.b16 %v508, %v507
    %v528 = vpack.c.b16 %v510, %v509
    %v529 = vpack.c.b16 %v512, %v511
    %v530 = vpack.c.b16 %v514, %v513
    %547 = vmatpush.bf16.msra.mxu0 %v522
    %548 = vmatpush.bf16.msra.mxu0 %v521
    %549 = vmatpush.bf16.msra.mxu0 %v520
    %550 = vmatpush.bf16.msra.mxu0 %v519
    %551 = vmatpush.bf16.msra.mxu0 %v518
    %552 = vmatpush.bf16.msra.mxu0 %v517
    %553 = vmatpush.bf16.msra.mxu0 %v516
    %554 = vmatpush.bf16.msra.mxu0 %v515
    %555 = vmatmul.bf16.gmra.mxu0 %v413
    %v556 = vpop.f32.mrf.mxu0
    %v557 = vadd.f32 %v449, %v556
    %v558 = vpop.f32.mrf.mxu0
    %559 = vdwg.mxu0
    %560 = vmatpush.bf16.msra.mxu0 %v530
    %561 = vmatpush.bf16.msra.mxu0 %v529
    %562 = vmatpush.bf16.msra.mxu0 %v528
    %563 = vmatpush.bf16.msra.mxu0 %v527
    %564 = vmatpush.bf16.msra.mxu0 %v526
    %565 = vmatpush.bf16.msra.mxu0 %v525
    %566 = vmatpush.bf16.msra.mxu0 %v524
    %567 = vmatpush.bf16.msra.mxu0 %v523
    %568 = vmatmul.bf16.gmra.mxu0 %v414
    %v569 = vpop.f32.mrf.mxu0
    %v570 = vadd.f32 %v557, %v569
    %v571 = vpop.f32.mrf.mxu0
    %572 = vdwg.mxu0
    %v573 = vlaneseq
    %v574 = vand.u32 %v573, 127
    %v575 = vmax.f32 %v570, -20.0
    %v576 = vmin.f32 %v575, 2.0
    %v577 = vmul.f32 %v576, 1.442695
    %v578 = vpow.pop %v577
    %vm579 = vcmp.ge.s32.totalorder %v574, 8
    %v580 = vsel %vm579, %v578, %v570
    %vm581 = vcmask 123904
    %582 = vst.msk [vmem:[%s9] sm:$0x3] %vm581, %v580
    // Predicated region
    $region42: #{actor_forward.1} parent=1 // pred_check
      _
    $region43: #{actor_forward.1} parent=1 // pred_check_branch
      %584 = sbr.rel (0) target = $region45
    $region44: #{actor_forward.1} parent=1 // pred_region
      _
    $region45: #{actor_forward.1} parent=1 // pred_fallthru
      _
    // Predicated region
    $region46: #{actor_forward.1} parent=1 // pred_check
      _
    $region47: #{actor_forward.1} parent=1 // pred_check_branch
      %586 = sbr.rel (0) target = $region49
    $region48: #{actor_forward.1} parent=1 // pred_region
      _
    $region49: #{actor_forward.1} parent=1 // pred_fallthru
      _
    %587 = vsyncpa [#allocation3], 1

</llo_original>
